<compile_context>
chip_gen: v6e
topology: v6e:2x2x1
jax: 0.10.0
libtpu: 0.0.40
codegen_flags: <defaults>
</compile_context>

<pallas_src>
import math

import jax
import jax.numpy as jnp
from jax import lax
from jax.experimental import pallas as pl
from jax.experimental.pallas import tpu as pltpu

LANE = 128
SUBLANE = 8
# 8192 rows x 128 lanes x 4 B = 4 MiB per f32 input block; 2 inputs x 2
# pipeline buffers = 16 MiB, well under the 32 MiB scoped-VMEM limit set below.
MAX_BLOCK_ROWS = 8192
# Rows per inner compute chunk: bounds live elementwise temporaries to
# ~256 KiB each, independent of the DMA block size.
CHUNK_ROWS = 512
VMEM_LIMIT_BYTES = 32 * 1024 * 1024


def _round_up(x, m):
    return -(-x // m) * m


def _int_pow(x, e):
    """x**e for integer e >= 1 via exponentiation by squaring (VPU muls)."""
    result = None
    base = x
    while e > 0:
        if e & 1:
            result = base if result is None else result * base
        e >>= 1
        if e:
            base = base * base
    return result


def _make_focal_kernel(gamma, rows, block_rows, chunk_rows, needs_row_mask,
                       binary_targets):
    """Kernel body with all static configuration closed over."""
    g = float(gamma)
    int_gamma = int(g) if (g.is_integer() and 0.0 <= g <= 64.0) else None
    num_chunks = block_rows // chunk_rows

    def focal_weight(p):
        if int_gamma is not None:
            if int_gamma == 0:
                return None            # weight == 1
            return _int_pow(p, int_gamma)
        return p ** g                  # non-integer gamma -> EUP pow

    def kernel(o_ref, t_ref, out_ref):
        if needs_row_mask:
            # Row-unit arithmetic: rows fits int32 for any realistic HBM size.
            valid_rows = rows - pl.program_id(0) * block_rows

        def chunk_sum(c, acc):
            start = c * chunk_rows
            if not isinstance(start, int):
                start = pl.multiple_of(start, chunk_rows)
            o = o_ref[pl.ds(start, chunk_rows), :].astype(jnp.float32)
            t = t_ref[pl.ds(start, chunk_rows), :].astype(jnp.float32)

            if binary_targets:
                # Hard 0/1 targets: single transcendental per element.
                p_t = t * o + (1.0 - t) * (1.0 - o)
                bce = -jnp.maximum(jnp.log(p_t), -100.0)
                p = 1.0 - p_t          # == 1 - exp(-bce) up to f32 rounding
            else:
                # General (soft-target) path; PyTorch BCELoss -100 log clamp.
                log_o = jnp.maximum(jnp.log(o), -100.0)
                log_1mo = jnp.maximum(jnp.log1p(-o), -100.0)
                bce = -(t * log_o + (1.0 - t) * log_1mo)
                p = 1.0 - jnp.exp(-bce)

            w = focal_weight(p)
            focal = bce if w is None else w * bce

            if needs_row_mask:
                # Only the undefined tail rows of the last grid block need
                # zeroing; one select per element (kills any NaN there).
                row_id = lax.broadcasted_iota(jnp.int32, (chunk_rows, LANE), 0)
                focal = jnp.where(row_id < (valid_rows - c * chunk_rows),
                                  focal, 0.0)

            # Fold the chunk into one (8,128) slab with leading-axis VPU adds
            # (no XLU); the reshape regroups whole (8,128) tiles only.
            return acc + jnp.sum(
                focal.reshape(chunk_rows // SUBLANE, SUBLANE, LANE), axis=0)

        acc0 = jnp.zeros((SUBLANE, LANE), jnp.float32)
        if num_chunks == 1:
            out_ref[...] = chunk_sum(0, acc0)
        else:
            out_ref[...] = lax.fori_loop(0, num_chunks, chunk_sum, acc0)

    return kernel


def focal_bce_loss(outputs, targets, gamma, *, binary_targets=False,
                   block_rows=None, chunk_rows=None):
    """Focal BCE loss (scalar mean), computed in a Pallas TPU kernel.

    `binary_targets=True` is an opt-in fast path (1 transcendental/element)
    valid only for hard 0/1 targets; the default path supports soft targets.
    `block_rows` / `chunk_rows` are tuning/testing overrides.
    """
    assert outputs.shape == targets.shape
    n = int(math.prod(outputs.shape))
    assert n > 0

    # Keep the caller's dtype (bf16 passes through, halving HBM traffic);
    # math is f32 inside the kernel.
    flat_o = outputs.reshape(-1)
    flat_t = targets.reshape(-1)

    # Lane padding with (o=1, t=1): contributes exactly zero loss, so padded
    # lanes never need masking.  Zero-copy reshape when n % 128 == 0.
    pad = (-n) % LANE
    if pad:
        flat_o = jnp.pad(flat_o, (0, pad), constant_values=1.0)
        flat_t = jnp.pad(flat_t, (0, pad), constant_values=1.0)
    rows = (n + pad) // LANE
    o2d = flat_o.reshape(rows, LANE)
    t2d = flat_t.reshape(rows, LANE)

    if chunk_rows is None:
        chunk_rows = min(CHUNK_ROWS, _round_up(rows, SUBLANE))
    if block_rows is None:
        block_rows = min(MAX_BLOCK_ROWS, _round_up(rows, chunk_rows))
    assert chunk_rows % SUBLANE == 0 and block_rows % chunk_rows == 0
    grid = -(-rows // block_rows)

    # Undefined data exists only in the tail rows of the last grid block;
    # elide the per-element mask entirely when the tiling is exact.
    needs_row_mask = (rows % block_rows) != 0

    kernel = _make_focal_kernel(float(gamma), rows, block_rows, chunk_rows,
                                needs_row_mask, binary_targets)

    n_proc = grid * block_rows * LANE
    cost = pl.CostEstimate(
        flops=15 * n_proc,
        transcendentals=(1 if binary_targets else 3) * n_proc,
        bytes_accessed=(o2d.size * o2d.dtype.itemsize
                        + t2d.size * t2d.dtype.itemsize
                        + grid * SUBLANE * LANE * 4),
    )

    partials = pl.pallas_call(
        kernel,
        out_shape=jax.ShapeDtypeStruct((grid * SUBLANE, LANE), jnp.float32),
        grid_spec=pltpu.PrefetchScalarGridSpec(
            num_scalar_prefetch=0,
            grid=(grid,),
            in_specs=[
                pl.BlockSpec((block_rows, LANE), lambda i: (i, 0)),
                pl.BlockSpec((block_rows, LANE), lambda i: (i, 0)),
            ],
            out_specs=pl.BlockSpec((SUBLANE, LANE), lambda i: (i, 0)),
        ),
        compiler_params=pltpu.CompilerParams(
            dimension_semantics=("parallel",),
            vmem_limit_bytes=VMEM_LIMIT_BYTES,
        ),
        cost_estimate=cost,
    )(o2d, t2d)

    # Tiny lane-dense final reduction + mean in plain JAX.
    return jnp.sum(partials) / jnp.float32(n)


def focal_bce_loss_ref(outputs, targets, gamma):
    """Pure-JAX reference for verification."""
    o = outputs.astype(jnp.float32)
    t = targets.astype(jnp.float32)
    bce = -(t * jnp.maximum(jnp.log(o), -100.0)
            + (1.0 - t) * jnp.maximum(jnp.log1p(-o), -100.0))
    focal = (1.0 - jnp.exp(-bce)) ** gamma * bce
    return jnp.mean(focal)


if __name__ == "__main__":
    gamma = 2.0  # FocalBCELoss(gamma=2.0)

    key = jax.random.PRNGKey(0)
    k1, k2, k3, k4 = jax.random.split(key, 4)

    # NCHW probabilities (post-sigmoid) and hard binary targets.
    outputs = jax.nn.sigmoid(jax.random.normal(k1, (2, 4, 16, 16), jnp.float32))
    targets = (jax.random.uniform(k2, (2, 4, 16, 16)) > 0.5).astype(jnp.float32)

    loss = jax.block_until_ready(focal_bce_loss(outputs, targets, gamma))
    ref = focal_bce_loss_ref(outputs, targets, gamma)
    assert jnp.allclose(loss, ref, rtol=1e-5, atol=1e-6), (loss, ref)

    # Opt-in single-transcendental fast path (valid for hard 0/1 targets).
    loss_fast = jax.block_until_ready(
        focal_bce_loss(outputs, targets, gamma, binary_targets=True))
    assert jnp.allclose(loss_fast, ref, rtol=1e-5, atol=1e-6), (loss_fast, ref)

    # Odd total size + soft targets + forced multi-block tiling: exercises the
    # lane padding, the chunked inner loop and the last-block-only row mask.
    outputs2 = jax.nn.sigmoid(jax.random.normal(k3, (5, 4, 16, 17), jnp.float32))
    targets2 = jax.random.uniform(k4, (5, 4, 16, 17), dtype=jnp.float32)
    loss2 = jax.block_until_ready(
        focal_bce_loss(outputs2, targets2, gamma, block_rows=16, chunk_rows=8))
    ref2 = focal_bce_loss_ref(outputs2, targets2, gamma)
    assert jnp.allclose(loss2, ref2, rtol=1e-5, atol=1e-6), (loss2, ref2)

    print("KERNEL_OK")
</pallas_src>

<mosaic_0001>
module attributes {stable_mosaic.version = 11 : i64} {
  func.func @kernel(%arg0: i32, %arg1: memref<16x128xf32, #tpu.memory_space<vmem>>, %arg2: memref<16x128xf32, #tpu.memory_space<vmem>>, %arg3: memref<8x128xf32, #tpu.memory_space<vmem>>) attributes {dimension_semantics = [#tpu.dimension_semantics<parallel>], iteration_bounds = array<i64: 1>, scalar_prefetch = 0 : i64, scratch_operands = 0 : i64, tpu.core_type = #tpu.core_type<tc>, window_params = [{transform_indices = @transform_0, window_bounds = array<i64: 16, 128>}, {transform_indices = @transform_1, window_bounds = array<i64: 16, 128>}, {transform_indices = @transform_2, window_bounds = array<i64: 8, 128>}]} {
    %cst = arith.constant 0.000000e+00 : f32
    %0 = vector.broadcast %cst : f32 to vector<8x128xf32>
    %c0 = arith.constant 0 : index
    %c0_0 = arith.constant 0 : index
    %1 = vector.load %arg1[%c0, %c0_0] : memref<16x128xf32, #tpu.memory_space<vmem>>, vector<16x128xf32>
    %c0_1 = arith.constant 0 : index
    %c0_2 = arith.constant 0 : index
    %2 = vector.load %arg2[%c0_1, %c0_2] : memref<16x128xf32, #tpu.memory_space<vmem>>, vector<16x128xf32>
    %3 = math.log %1 : vector<16x128xf32>
    %cst_3 = arith.constant -1.000000e+02 : f32
    %4 = vector.broadcast %cst_3 : f32 to vector<16x128xf32>
    %5 = arith.maximumf %3, %4 : vector<16x128xf32>
    %cst_4 = arith.constant 0.000000e+00 : f32
    %6 = vector.broadcast %cst_4 : f32 to vector<16x128xf32>
    %7 = arith.subf %6, %1 : vector<16x128xf32>
    %8 = math.log1p %7 : vector<16x128xf32>
    %cst_5 = arith.constant -1.000000e+02 : f32
    %9 = vector.broadcast %cst_5 : f32 to vector<16x128xf32>
    %10 = arith.maximumf %8, %9 : vector<16x128xf32>
    %11 = arith.mulf %2, %5 : vector<16x128xf32>
    %cst_6 = arith.constant 1.000000e+00 : f32
    %12 = vector.broadcast %cst_6 : f32 to vector<16x128xf32>
    %13 = arith.subf %12, %2 : vector<16x128xf32>
    %14 = arith.mulf %13, %10 : vector<16x128xf32>
    %15 = arith.addf %11, %14 : vector<16x128xf32>
    %cst_7 = arith.constant 0.000000e+00 : f32
    %16 = vector.broadcast %cst_7 : f32 to vector<16x128xf32>
    %17 = arith.subf %16, %15 : vector<16x128xf32>
    %cst_8 = arith.constant 0.000000e+00 : f32
    %18 = vector.broadcast %cst_8 : f32 to vector<16x128xf32>
    %19 = arith.subf %18, %17 : vector<16x128xf32>
    %20 = math.exp %19 : vector<16x128xf32>
    %cst_9 = arith.constant 1.000000e+00 : f32
    %21 = vector.broadcast %cst_9 : f32 to vector<16x128xf32>
    %22 = arith.subf %21, %20 : vector<16x128xf32>
    %23 = arith.mulf %22, %22 : vector<16x128xf32>
    %24 = arith.mulf %23, %17 : vector<16x128xf32>
    %25 = vector.shape_cast %24 : vector<16x128xf32> to vector<2x8x128xf32>
    %cst_10 = arith.constant dense<0.000000e+00> : vector<8x128xf32>
    %26 = vector.multi_reduction <add>, %25, %cst_10 [0] : vector<2x8x128xf32> to vector<8x128xf32>
    %27 = arith.addf %0, %26 : vector<8x128xf32>
    %c0_11 = arith.constant 0 : index
    %c0_12 = arith.constant 0 : index
    %28 = vector.load %arg3[%c0_11, %c0_12] : memref<8x128xf32, #tpu.memory_space<vmem>>, vector<8x128xf32>
    tpu.vector_store %arg3[%c0_11, %c0_12], %27 {strides = array<i32>} : memref<8x128xf32, #tpu.memory_space<vmem>>, vector<8x128xf32>,
    return
  }
  func.func @transform_0(%arg0: i32) -> (i32, i32) {
    %c0_i32 = arith.constant 0 : i32
    %c0_i32_0 = arith.constant 0 : i32
    return %arg0, %c0_i32 : i32, i32
  }
  func.func @transform_1(%arg0: i32) -> (i32, i32) {
    %c0_i32 = arith.constant 0 : i32
    %c0_i32_0 = arith.constant 0 : i32
    return %arg0, %c0_i32 : i32, i32
  }
  func.func @transform_2(%arg0: i32) -> (i32, i32) {
    %c0_i32 = arith.constant 0 : i32
    %c0_i32_0 = arith.constant 0 : i32
    return %arg0, %c0_i32 : i32, i32
  }
}

</mosaic_0001>

<llo_original>
// kernel: tpu_custom_call.1
$region0: #{tpu_custom_call.1}
  #allocation0 [shape = 'u32[]', space=smem, size = 0x4, offset = 0x4, fixed_abs, tag = 'smem constant byte address 0x4 - core index']
  #allocation1 [shape = 'u32[144,128]{1,0:T(1,128)}', space=vmem, size = 0x12000, scoped, tag = 'internal scratch']
  %s0 = inlined_call_operand.hbm [shape: f32[16,128], index: 0, kind: input, shape index: {}]
  %s1 = inlined_call_operand.hbm [shape: f32[16,128], index: 1, kind: input, shape index: {}]
  %s2 = inlined_call_operand.hbm [shape: f32[8,128], index: 2, kind: output, shape index: {}]
  %s3 = sld [smem:[#allocation0]]
  $region26: #{tpu_custom_call.1} parent=0
    _
  %s5 = ssub.s32 1, %s3
  %s6 = scalar_select 0, %s5, %s3
  $region1: #{tpu_custom_call.1} parent=0
    #allocation2 [shape = 'u8[8192]{0}', space=vmem, size = 0x2000, scoped, tag = 'input window, operand 0, single buffered']
    #allocation3 [shape = 's32[1]{0}', space=sflag, size = 0x4, scoped, tag = 'scoped memory for tpu_custom_call.1']
    #allocation4 [shape = 's32[1]{0}', space=sflag, size = 0x4, scoped, tag = 'scoped memory for tpu_custom_call.1']
    #allocation5 [shape = 'u8[8192]{0}', space=vmem, size = 0x2000, scoped, tag = 'input window, operand 1, single buffered']
    #allocation6 [shape = 's32[1]{0}', space=sflag, size = 0x4, scoped, tag = 'scoped memory for tpu_custom_call.1']
    #allocation7 [shape = 'u8[4096]{0}', space=vmem, size = 0x1000, scoped, tag = 'output window, operand 0, single buffered']
    %7 = vsyncpa [#allocation3], 0
    %8 = vsyncpa [#allocation6], 0
    %9 = vsyncpa [#allocation4], 0
    // Predicated region
    $region2: #{tpu_custom_call.1} parent=1 // pred_check
      _
    $region3: #{tpu_custom_call.1} parent=1 // pred_check_branch
      %11 = sbr.rel (0) target = $region5
    $region4: #{tpu_custom_call.1} parent=1 // pred_region
      %s13 = ssub.s32 256, 256
      %14 = vsyncadd [#allocation3], %s13
      %s15 = sshll.u32 [#allocation2], 4
      %s16 = int_to_ptr.vmem [resolvable:$true] %s15
      %21 = dma.hbm_to_vmem [thread:$0]  %s0, 256, %s16, [#allocation3], 128, 128, 8
    $region5: #{tpu_custom_call.1} parent=1 // pred_fallthru
      _
    // Predicated region
    $region6: #{tpu_custom_call.1} parent=1 // pred_check
      _
    $region7: #{tpu_custom_call.1} parent=1 // pred_check_branch
      %23 = sbr.rel (0) target = $region9
    $region8: #{tpu_custom_call.1} parent=1 // pred_region
      %s25 = ssub.s32 256, 256
      %26 = vsyncadd [#allocation6], %s25
      %s27 = sshll.u32 [#allocation5], 4
      %s28 = int_to_ptr.vmem [resolvable:$true] %s27
      %33 = dma.hbm_to_vmem [thread:$0]  %s1, 256, %s28, [#allocation6], 128, 128, 8
    $region9: #{tpu_custom_call.1} parent=1 // pred_fallthru
      _
    // Predicated region
    $region10: #{tpu_custom_call.1} parent=1 // pred_check
      _
    $region11: #{tpu_custom_call.1} parent=1 // pred_check_branch
      %35 = sbr.rel (0) target = $region13
    $region12: #{tpu_custom_call.1} parent=1 // pred_region
      %36 = dma.done [#allocation3], 256
    $region13: #{tpu_custom_call.1} parent=1 // pred_fallthru
      _
    // Predicated region
    $region14: #{tpu_custom_call.1} parent=1 // pred_check
      _
    $region15: #{tpu_custom_call.1} parent=1 // pred_check_branch
      %38 = sbr.rel (0) target = $region17
    $region16: #{tpu_custom_call.1} parent=1 // pred_region
      %39 = dma.done [#allocation6], 256
    $region17: #{tpu_custom_call.1} parent=1 // pred_fallthru
      _
    %v40 = vld [vmem:[#allocation2] sm:$0xff]
    %v41 = vld [vmem:[#allocation2 + $0x8] sm:$0xff]
    %v42 = vld [vmem:[#allocation5] sm:$0xff]
    %v43 = vld [vmem:[#allocation5 + $0x8] sm:$0xff]
    %v44 = vlog2.pop %v40
    %v45 = vmul.f32 %v44, 0.6931472
    %v46 = vlog2.pop %v41
    %v47 = vmul.f32 %v46, 0.6931472
    %v48 = vmax.f32 %v45, -100.0
    %v49 = vmax.f32 %v47, -100.0
    %v50 = vsub.f32 0.0, %v40
    %v51 = vsub.f32 0.0, %v41
    %v52 = vadd.f32 %v50, 1.0
    %v53 = vlog2.pop %v52
    %v54 = vmul.f32 %v53, 0.6931472
    %v55 = vmul.f32 -0.5, %v50
    %v56 = vadd.f32 %v55, 1.0
    %v57 = vmul.f32 %v56, %v50
    %v58 = vand.u32 2147483647, %v50
    %vm59 = vcmp.lt.f32.partialorder %v58, 0.0004427343
    %v60 = vsel %vm59, %v57, %v54
    %v61 = vadd.f32 %v51, 1.0
    %v62 = vlog2.pop %v61
    %v63 = vmul.f32 %v62, 0.6931472
    %v64 = vmul.f32 -0.5, %v51
    %v65 = vadd.f32 %v64, 1.0
    %v66 = vmul.f32 %v65, %v51
    %v67 = vand.u32 2147483647, %v51
    %vm68 = vcmp.lt.f32.partialorder %v67, 0.0004427343
    %v69 = vsel %vm68, %v66, %v63
    %v70 = vmax.f32 %v60, -100.0
    %v71 = vmax.f32 %v69, -100.0
    %v72 = vmul.f32 %v42, %v48
    %v73 = vmul.f32 %v43, %v49
    %v74 = vsub.f32 1.0, %v42
    %v75 = vsub.f32 1.0, %v43
    %v76 = vmul.f32 %v74, %v70
    %v77 = vmul.f32 %v75, %v71
    %v78 = vadd.f32 %v72, %v76
    %v79 = vadd.f32 %v73, %v77
    %v80 = vsub.f32 0.0, %v78
    %v81 = vsub.f32 0.0, %v79
    %v82 = vsub.f32 0.0, %v80
    %v83 = vsub.f32 0.0, %v81
    %v84 = vmul.f32 %v82, 1.442695
    %v85 = vpow.pop %v84
    %v86 = vmul.f32 %v83, 1.442695
    %v87 = vpow.pop %v86
    %v88 = vsub.f32 1.0, %v85
    %v89 = vsub.f32 1.0, %v87
    %v90 = vmul.f32 %v88, %v88
    %v91 = vmul.f32 %v89, %v89
    %v92 = vmul.f32 %v90, %v80
    %v93 = vmul.f32 %v91, %v81
    %v94 = vadd.f32 %v92, %v93
    %v95 = vadd.f32 %v94, 0.0
    %96 = vst [vmem:[#allocation7] sm:$0xff] %v95
    // Predicated region
    $region18: #{tpu_custom_call.1} parent=1 // pred_check
      _
    $region19: #{tpu_custom_call.1} parent=1 // pred_check_branch
      %98 = sbr.rel (0) target = $region21
    $region20: #{tpu_custom_call.1} parent=1 // pred_region
      %s100 = ssub.s32 128, 128
      %101 = vsyncadd [#allocation4], %s100
      %s103 = sshll.u32 [#allocation7], 4
      %s104 = int_to_ptr.vmem [resolvable:$true] %s103
      %106 = dma.vmem_to_hbm [thread:$0]  %s104, 128, %s2, [#allocation4]
    $region21: #{tpu_custom_call.1} parent=1 // pred_fallthru
      _
    // Predicated region
    $region22: #{tpu_custom_call.1} parent=1 // pred_check
      _
    $region23: #{tpu_custom_call.1} parent=1 // pred_check_branch
      %108 = sbr.rel (0) target = $region25
    $region24: #{tpu_custom_call.1} parent=1 // pred_region
      %109 = dma.done [#allocation4], 128
    $region25: #{tpu_custom_call.1} parent=1 // pred_fallthru
      _
    %110 = vsyncpa [#allocation3], 1
    %111 = vsyncpa [#allocation6], 1
    %112 = vsyncpa [#allocation4], 1

</llo_original>
